<compile_context>
chip_gen: v5e
topology: v5e:2x2
jax: 0.10.0
libtpu: 0.0.40
codegen_flags: <defaults>
</compile_context>

<pallas_src>
import numpy as np
import jax
import jax.numpy as jnp
from jax.experimental import pallas as pl
from jax.experimental.pallas import tpu as pltpu

NUM_ATTR = 22                      # nums_attribute_node
NUM_THER = 6                       # nums_therapy_node
NUM_NODES = NUM_ATTR + NUM_THER    # 28 combined nodes (attrs first)
D = 16                             # embedding_dim == hidden_dim
NUM_RULES = 4
NEG_LEN = 1                        # negative_length
PAD_POS = 10                       # F.pad target length for query_embed
SLOTS = PAD_POS + NEG_LEN          # 11 score slots per attribute node
SLAB_W = SLOTS * D                 # 176 lanes in the packed output slab


# ------------------------------ Pallas kernel ------------------------------

def _sigmoid(x):
    # == torch.sigmoid; tanh form avoids exp overflow and runs in the EUP slot.
    return 0.5 * (jnp.tanh(0.5 * x) + 1.0)


def gcnnet_fused_kernel(x_ref, pack_ref, qsum_ref, kmask_ref, ascale_ref,
                        ahat_ref, wg_ref, bg_ref, rep_ref, ma_ref, mt_ref,
                        fw_ref, slab_ref, loss_ref):
    """Whole GCNNet forward hot path on the combined (28, 16) node table.

    x        : (28,16)  embedding table (attrs rows 0..21, therapies 22..27)
    pack     : (28,176) packed positive|negative vectors per node (lane-dense)
    qsum_sel : (28,28)  0/1 rows summing each node's query embeddings
    key_mask : (28,28)  0/1 key membership per node
    attn_scale:(28,1)   1 / (num_queries * sqrt(d_k))
    a_hat    : (28,28)  gcn_norm'd dense adjacency (self loops included)
    wg/bg    : GCNConv weight^T (16,16) and bias (1,16)
    rep      : (16,176) repeats a 16-vector into the 11 score slots
    ma/mt    : (4,28)   rule-mean matrices (attr / therapy) for loss2
    fw       : (3,)     fused_weight scalars (SMEM)
    """
    x = x_ref[...]                                                     # (28,16)

    # ---- Attention (softmax unused in torch path; dropout = identity) ----
    q_sum = jnp.dot(qsum_ref[...], x, preferred_element_type=jnp.float32)
    raw = jax.lax.dot_general(q_sum, x, (((1,), (1,)), ((), ())),
                              preferred_element_type=jnp.float32)      # (28,28)
    ctx = jnp.dot(kmask_ref[...] * raw, x,
                  preferred_element_type=jnp.float32)                  # (28,16)
    attn = ctx * ascale_ref[...]            # == torch.mean over queries / sqrt(d)

    # ---- GCNConv: A_hat @ (X @ W^T) + b (stays in VMEM) ----
    xw = jnp.dot(x, wg_ref[...], preferred_element_type=jnp.float32)
    conv = jnp.dot(ahat_ref[...], xw,
                   preferred_element_type=jnp.float32) + bg_ref[...]

    # ---- fuse: mixed = w0*embed + w1*attention + w2*conv ----
    mixed = fw_ref[0] * x + fw_ref[1] * attn + fw_ref[2] * conv        # (28,16)

    # ---- sigmoid scoring, packed lane-dense: sigmoid(mixed ⊙ pack) ----
    rep = jnp.dot(mixed, rep_ref[...],
                  preferred_element_type=jnp.float32)                  # (28,176)
    slab_ref[...] = _sigmoid(rep * pack_ref[...])

    # ---- loss2 = sum_r sigmoid(<mean_r(attr mixed), mean_r(therapy mixed)>) ----
    va = jnp.dot(ma_ref[...], mixed, preferred_element_type=jnp.float32)  # (4,16)
    vt = jnp.dot(mt_ref[...], mixed, preferred_element_type=jnp.float32)  # (4,16)
    s = _sigmoid(jnp.sum(va * vt, axis=-1, keepdims=True))                # (4,1)
    loss_ref[...] = jnp.sum(s, axis=0, keepdims=True)                     # (1,1)


# ------------------------ synthetic data / parameters ----------------------

def build_synthetic_batch_data():
    # Deterministic stand-in for the PyG HeteroData batch + helper.return_rule.
    attr_x = list(range(NUM_ATTR))
    ther_x = list(range(NUM_THER))
    rules = list(range(1, NUM_RULES + 1))
    attr_rule_tag = {a: [(a % NUM_RULES) + 1] for a in attr_x}
    ther_rule_tag = {t: [(t % NUM_RULES) + 1] for t in ther_x}
    rule = [[a for a in attr_x if (a % NUM_RULES) + 1 == r] for r in rules]
    edges = [(a, t) for a in attr_x for t in ther_x
             if set(attr_rule_tag[a]) & set(ther_rule_tag[t])]
    edge_index = np.array(edges, dtype=np.int64).T            # (2, E)
    return dict(attr_x=attr_x, ther_x=ther_x, rules=rules,
                attr_rule_tag=attr_rule_tag, ther_rule_tag=ther_rule_tag,
                rule=rule, edge_index=edge_index)


def init_params(key):
    ks = jax.random.split(key, 6)

    def lin(kw, kb, out_f, in_f):
        bound = 1.0 / np.sqrt(in_f)
        w = jax.random.uniform(kw, (out_f, in_f), jnp.float32, -bound, bound)
        b = jax.random.uniform(kb, (1, out_f), jnp.float32, -bound, bound)
        return w, b

    w_attr, b_attr = lin(ks[0], ks[1], D, NUM_ATTR)   # embed_attributes
    w_ther, b_ther = lin(ks[2], ks[3], D, NUM_THER)   # embed_therapies
    w_gcn, b_gcn = lin(ks[4], ks[5], D, D)            # conv_layer (GCNConv)
    return dict(W_attr_T=w_attr.T, b_attr=b_attr,
                W_ther_T=w_ther.T, b_ther=b_ther,
                W_gcn_T=w_gcn.T, b_gcn=b_gcn)


def build_gcn_adjacency(edge_index, num_attr_nodes, num_nodes):
    # torch_geometric gcn_norm: add self loops, degree on targets, sym norm,
    # aggregate out[col] += norm * x[row].
    src = edge_index[0].astype(np.int64)
    dst = edge_index[1].astype(np.int64) + num_attr_nodes   # edge_pre_for_conv[1] += Na
    loops = np.arange(num_nodes, dtype=np.int64)
    row = np.concatenate([src, loops])     # source
    col = np.concatenate([dst, loops])     # target
    deg = np.zeros(num_nodes, np.float32)
    np.add.at(deg, col, 1.0)
    dinv = np.where(deg > 0, deg ** -0.5, 0.0).astype(np.float32)
    a_hat = np.zeros((num_nodes, num_nodes), np.float32)
    np.add.at(a_hat, (col, row), dinv[row] * dinv[col])
    return a_hat


def build_static_tables(bd):
    """Structure-only tables (no weights): built once on the host in numpy."""
    attr_x, ther_x = bd['attr_x'], bd['ther_x']
    rule = bd['rule']
    attr_rt, ther_rt = bd['attr_rule_tag'], bd['ther_rule_tag']
    negative_masks = [1, 1]

    qsum_sel = np.zeros((NUM_NODES, NUM_NODES), np.float32)
    key_mask = np.zeros((NUM_NODES, NUM_NODES), np.float32)
    attn_scale = np.zeros((NUM_NODES, 1), np.float32)
    tv_idx = np.zeros((NUM_ATTR, PAD_POS), np.int32)
    tv_msk = np.zeros((NUM_ATTR, PAD_POS), np.float32)
    neg_idx = np.zeros((NUM_NODES, NEG_LEN), np.int32)
    neg_msk = np.zeros((NUM_NODES, NEG_LEN), np.float32)
    num_real_positive = []

    def pick_negative(exclude_therapies, use_therapy, use_attr):
        # Faithful port of GCNNet.get_negative_query (the attribute branch
        # appends regardless of the inner rule check, exactly as in torch).
        picks = []
        if use_therapy:
            for t in ther_x:
                if t not in exclude_therapies:
                    if len(picks) >= NEG_LEN:
                        break
                    picks.append(NUM_ATTR + t)
        if use_attr:
            for a in attr_x:
                if len(picks) >= NEG_LEN:
                    break
                picks.append(a)
        return picks[:NEG_LEN]             # remaining slots stay zero-masked

    # ---- attribute-node branch (combined rows 0..21) ----
    for a in attr_x:
        tags = attr_rt[a]
        query_set = sorted({t for t in ther_x if any(r in ther_rt[t] for r in tags)})
        key_list = sorted({i for r in tags for i in rule[r - 1]})
        nq = len(query_set)
        num_real_positive.append(nq)
        for t in query_set:
            qsum_sel[a, NUM_ATTR + t] = 1.0
        for k in key_list:
            key_mask[a, k] = 1.0
        attn_scale[a, 0] = 1.0 / (max(nq, 1) * np.sqrt(D))
        tv_idx[a, :nq] = np.asarray(query_set, np.int32)
        tv_msk[a, :nq] = 1.0
        for j, p in enumerate(pick_negative(query_set,
                                            negative_masks[0] == 1,
                                            negative_masks[1] == 1)):
            neg_idx[a, j] = p
            neg_msk[a, j] = 1.0

    # ---- therapy-node branch (combined rows 22..27) ----
    for t in ther_x:
        row = NUM_ATTR + t
        tags = ther_rt[t]
        same = sorted({t2 for t2 in ther_x if any(r in ther_rt[t2] for r in tags)})
        query_list = sorted({i for r in tags for i in rule[r - 1]})
        nq = len(query_list)
        for a in query_list:
            qsum_sel[row, a] = 1.0
        for t2 in same:
            key_mask[row, NUM_ATTR + t2] = 1.0
        attn_scale[row, 0] = 1.0 / (max(nq, 1) * np.sqrt(D))
        for j, p in enumerate(pick_negative(same, True, False)):   # masks [1, 0]
            neg_idx[row, j] = p
            neg_msk[row, j] = 1.0

    a_hat = build_gcn_adjacency(bd['edge_index'], NUM_ATTR, NUM_NODES)

    # loss2 rule-mean matrices over the combined node axis
    ma = np.zeros((NUM_RULES, NUM_NODES), np.float32)
    mt = np.zeros((NUM_RULES, NUM_NODES), np.float32)
    for r in bd['rules']:
        attrs = [a for a in attr_x if r in attr_rt[a]]
        thers = [NUM_ATTR + t for t in ther_x if r in ther_rt[t]]
        ma[r - 1, attrs] = 1.0 / len(attrs)
        mt[r - 1, thers] = 1.0 / len(thers)

    # lane-replication matrix: (·,16) @ rep -> (·,176), 16-vector per slot
    rep = np.zeros((D, SLAB_W), np.float32)
    for p in range(SLOTS):
        rep[np.arange(D), p * D + np.arange(D)] = 1.0

    consts = dict(qsum_sel=qsum_sel, key_mask=key_mask, attn_scale=attn_scale,
                  a_hat=a_hat, ma=ma, mt=mt, rep=rep,
                  tv_idx=tv_idx, tv_msk=tv_msk, neg_idx=neg_idx, neg_msk=neg_msk)
    return consts, num_real_positive


# ------------------------------- forward -----------------------------------

@jax.jit
def gcnnet_forward_device(params, consts, fw):
    # Embedding tables: one_hot(i) @ W^T + b == row i of W^T + b.
    attr_table = params['W_attr_T'] + params['b_attr']          # (22,16)
    ther_table = params['W_ther_T'] + params['b_ther']          # (6,16)
    x = jnp.concatenate([attr_table, ther_table], axis=0)       # (28,16)

    # Structural gathers with static indices (fused by XLA, stays on device).
    tv = ther_table[consts['tv_idx']] * consts['tv_msk'][..., None]   # (22,10,16)
    neg = x[consts['neg_idx']] * consts['neg_msk'][..., None]         # (28,1,16)
    pack_attr = jnp.concatenate([tv, neg[:NUM_ATTR]], axis=1
                                ).reshape(NUM_ATTR, SLAB_W)           # (22,176)
    pack_ther = jnp.concatenate(
        [neg[NUM_ATTR:, 0, :],
         jnp.zeros((NUM_THER, SLAB_W - D), jnp.float32)], axis=1)     # (6,176)
    pack = jnp.concatenate([pack_attr, pack_ther], axis=0)            # (28,176)

    vmem = lambda: pl.BlockSpec(memory_space=pltpu.MemorySpace.VMEM)
    smem = pl.BlockSpec(memory_space=pltpu.MemorySpace.SMEM)
    slab, loss = pl.pallas_call(
        gcnnet_fused_kernel,
        in_specs=[vmem() for _ in range(11)] + [smem],
        out_specs=(vmem(), vmem()),
        out_shape=(jax.ShapeDtypeStruct((NUM_NODES, SLAB_W), jnp.float32),
                   jax.ShapeDtypeStruct((1, 1), jnp.float32)),
    )(x, pack, consts['qsum_sel'], consts['key_mask'], consts['attn_scale'],
      consts['a_hat'], params['W_gcn_T'], params['b_gcn'], consts['rep'],
      consts['ma'], consts['mt'], fw)

    result_attribute = slab[:NUM_ATTR].reshape(NUM_ATTR, SLOTS, D)    # (22,11,16)
    result_therapy = slab[NUM_ATTR:, :D].reshape(NUM_THER, NEG_LEN, D)  # (6,1,16)
    return result_attribute, result_therapy, loss[0, 0]


def gcnnet_forward(params, consts, num_real_positive, fused_weight=(0.0, 1.0, 0.0)):
    fw = jnp.asarray(fused_weight, jnp.float32)
    ra, rt, loss2 = gcnnet_forward_device(params, consts, fw)
    return ra, rt, num_real_positive, loss2


# --------------------------- float64 numpy reference -----------------------

def reference_forward_np(params, consts, fused_weight):
    def sig(v):
        return 1.0 / (1.0 + np.exp(-v))
    c = {k: np.asarray(v, np.float64) if np.asarray(v).dtype != np.int32
         else np.asarray(v) for k, v in consts.items()}
    A = np.asarray(params['W_attr_T'], np.float64) + np.asarray(params['b_attr'], np.float64)
    T = np.asarray(params['W_ther_T'], np.float64) + np.asarray(params['b_ther'], np.float64)
    X = np.concatenate([A, T], axis=0)
    q_sum = c['qsum_sel'] @ X
    ctx = (c['key_mask'] * (q_sum @ X.T)) @ X
    attn = ctx * c['attn_scale']
    conv = c['a_hat'] @ (X @ np.asarray(params['W_gcn_T'], np.float64)) \
        + np.asarray(params['b_gcn'], np.float64)
    fw = np.asarray(fused_weight, np.float64)
    mixed = fw[0] * X + fw[1] * attn + fw[2] * conv
    tv = T[c['tv_idx']] * c['tv_msk'][..., None]
    neg = X[c['neg_idx']] * c['neg_msk'][..., None]
    pack_a = np.concatenate([tv, neg[:NUM_ATTR]], axis=1)
    res_attr = sig(mixed[:NUM_ATTR, None, :] * pack_a)
    res_ther = sig(mixed[NUM_ATTR:, None, :] * neg[NUM_ATTR:])
    va, vt = c['ma'] @ mixed, c['mt'] @ mixed
    loss2 = np.sum(sig(np.sum(va * vt, axis=-1)))
    return res_attr, res_ther, loss2


# ----------------------------------- main -----------------------------------

if __name__ == "__main__":
    params = init_params(jax.random.PRNGKey(0))
    batch_data = build_synthetic_batch_data()
    consts_np, num_real_positive = build_static_tables(batch_data)
    consts = {k: jnp.asarray(v) for k, v in consts_np.items()}

    res_attr, res_ther, nrp, loss2 = gcnnet_forward(params, consts, num_real_positive)
    jax.block_until_ready((res_attr, res_ther, loss2))

    assert res_attr.shape == (NUM_ATTR, SLOTS, D)
    assert res_ther.shape == (NUM_THER, NEG_LEN, D)
    assert len(nrp) == NUM_ATTR
    assert np.isfinite(float(loss2))

    ref_attr, ref_ther, ref_loss2 = reference_forward_np(params, consts_np,
                                                         (0.0, 1.0, 0.0))
    np.testing.assert_allclose(np.asarray(res_attr), ref_attr, rtol=2e-3, atol=2e-3)
    np.testing.assert_allclose(np.asarray(res_ther), ref_ther, rtol=2e-3, atol=2e-3)
    np.testing.assert_allclose(float(loss2), ref_loss2, rtol=2e-3, atol=2e-3)

    print("KERNEL_OK")
</pallas_src>

<mosaic_0001>
module attributes {stable_mosaic.version = 11 : i64} {
  func.func @gcnnet_fused_kernel(%arg0: memref<28x16xf32, #tpu.memory_space<vmem>>, %arg1: memref<28x176xf32, #tpu.memory_space<vmem>>, %arg2: memref<28x28xf32, #tpu.memory_space<vmem>>, %arg3: memref<28x28xf32, #tpu.memory_space<vmem>>, %arg4: memref<28x1xf32, #tpu.memory_space<vmem>>, %arg5: memref<28x28xf32, #tpu.memory_space<vmem>>, %arg6: memref<16x16xf32, #tpu.memory_space<vmem>>, %arg7: memref<1x16xf32, #tpu.memory_space<vmem>>, %arg8: memref<16x176xf32, #tpu.memory_space<vmem>>, %arg9: memref<4x28xf32, #tpu.memory_space<vmem>>, %arg10: memref<4x28xf32, #tpu.memory_space<vmem>>, %arg11: memref<3xf32, #tpu.memory_space<smem>>, %arg12: memref<28x176xf32, #tpu.memory_space<vmem>>, %arg13: memref<1x1xf32, #tpu.memory_space<vmem>>) attributes {dimension_semantics = [], scalar_prefetch = 0 : i64, scratch_operands = 0 : i64, tpu.core_type = #tpu.core_type<tc>} {
    %c0 = arith.constant 0 : index
    %c0_0 = arith.constant 0 : index
    %0 = vector.load %arg0[%c0, %c0_0] : memref<28x16xf32, #tpu.memory_space<vmem>>, vector<28x16xf32>
    %c0_1 = arith.constant 0 : index
    %c0_2 = arith.constant 0 : index
    %1 = vector.load %arg2[%c0_1, %c0_2] : memref<28x28xf32, #tpu.memory_space<vmem>>, vector<28x28xf32>
    %cst = arith.constant dense<0.000000e+00> : vector<28x16xf32>
    %2 = tpu.matmul %1, %0, %cst {dimension_numbers = #tpu.dot_dimension_numbers<[1], [0], [0], [1], [0, 0, 1, 1], [], []>} : vector<28x28xf32>, vector<28x16xf32>, vector<28x16xf32> -> vector<28x16xf32>
    %cst_3 = arith.constant dense<0.000000e+00> : vector<28x28xf32>
    %3 = tpu.matmul %2, %0, %cst_3 {dimension_numbers = #tpu.dot_dimension_numbers<[1], [1], [0], [0], [0, 0, 1, 0], [], []>} : vector<28x16xf32>, vector<28x16xf32>, vector<28x28xf32> -> vector<28x28xf32>
    %c0_4 = arith.constant 0 : index
    %c0_5 = arith.constant 0 : index
    %4 = vector.load %arg3[%c0_4, %c0_5] : memref<28x28xf32, #tpu.memory_space<vmem>>, vector<28x28xf32>
    %5 = arith.mulf %4, %3 : vector<28x28xf32>
    %cst_6 = arith.constant dense<0.000000e+00> : vector<28x16xf32>
    %6 = tpu.matmul %5, %0, %cst_6 {dimension_numbers = #tpu.dot_dimension_numbers<[1], [0], [0], [1], [0, 0, 1, 1], [], []>} : vector<28x28xf32>, vector<28x16xf32>, vector<28x16xf32> -> vector<28x16xf32>
    %c0_7 = arith.constant 0 : index
    %c0_8 = arith.constant 0 : index
    %7 = vector.load %arg4[%c0_7, %c0_8] : memref<28x1xf32, #tpu.memory_space<vmem>>, vector<28x1xf32>
    %8 = vector.broadcast %7 : vector<28x1xf32> to vector<28x16xf32>
    %9 = arith.mulf %6, %8 : vector<28x16xf32>
    %c0_9 = arith.constant 0 : index
    %c0_10 = arith.constant 0 : index
    %10 = vector.load %arg6[%c0_9, %c0_10] : memref<16x16xf32, #tpu.memory_space<vmem>>, vector<16x16xf32>
    %cst_11 = arith.constant dense<0.000000e+00> : vector<28x16xf32>
    %11 = tpu.matmul %0, %10, %cst_11 {dimension_numbers = #tpu.dot_dimension_numbers<[1], [0], [0], [1], [0, 0, 1, 1], [], []>} : vector<28x16xf32>, vector<16x16xf32>, vector<28x16xf32> -> vector<28x16xf32>
    %c0_12 = arith.constant 0 : index
    %c0_13 = arith.constant 0 : index
    %12 = vector.load %arg5[%c0_12, %c0_13] : memref<28x28xf32, #tpu.memory_space<vmem>>, vector<28x28xf32>
    %cst_14 = arith.constant dense<0.000000e+00> : vector<28x16xf32>
    %13 = tpu.matmul %12, %11, %cst_14 {dimension_numbers = #tpu.dot_dimension_numbers<[1], [0], [0], [1], [0, 0, 1, 1], [], []>} : vector<28x28xf32>, vector<28x16xf32>, vector<28x16xf32> -> vector<28x16xf32>
    %c0_15 = arith.constant 0 : index
    %c0_16 = arith.constant 0 : index
    %14 = vector.load %arg7[%c0_15, %c0_16] : memref<1x16xf32, #tpu.memory_space<vmem>>, vector<1x16xf32>
    %15 = vector.broadcast %14 : vector<1x16xf32> to vector<28x16xf32>
    %16 = arith.addf %13, %15 : vector<28x16xf32>
    %c0_17 = arith.constant 0 : index
    %17 = memref.load %arg11[%c0_17] : memref<3xf32, #tpu.memory_space<smem>>
    %18 = vector.broadcast %17 : f32 to vector<28x16xf32>
    %19 = arith.mulf %18, %0 : vector<28x16xf32>
    %c1 = arith.constant 1 : index
    %20 = memref.load %arg11[%c1] : memref<3xf32, #tpu.memory_space<smem>>
    %21 = vector.broadcast %20 : f32 to vector<28x16xf32>
    %22 = arith.mulf %21, %9 : vector<28x16xf32>
    %23 = arith.addf %19, %22 : vector<28x16xf32>
    %c2 = arith.constant 2 : index
    %24 = memref.load %arg11[%c2] : memref<3xf32, #tpu.memory_space<smem>>
    %25 = vector.broadcast %24 : f32 to vector<28x16xf32>
    %26 = arith.mulf %25, %16 : vector<28x16xf32>
    %27 = arith.addf %23, %26 : vector<28x16xf32>
    %c0_18 = arith.constant 0 : index
    %c0_19 = arith.constant 0 : index
    %28 = vector.load %arg8[%c0_18, %c0_19] : memref<16x176xf32, #tpu.memory_space<vmem>>, vector<16x176xf32>
    %cst_20 = arith.constant dense<0.000000e+00> : vector<28x176xf32>
    %29 = tpu.matmul %27, %28, %cst_20 {dimension_numbers = #tpu.dot_dimension_numbers<[1], [0], [0], [1], [0, 0, 1, 1], [], []>} : vector<28x16xf32>, vector<16x176xf32>, vector<28x176xf32> -> vector<28x176xf32>
    %c0_21 = arith.constant 0 : index
    %c0_22 = arith.constant 0 : index
    %30 = vector.load %arg1[%c0_21, %c0_22] : memref<28x176xf32, #tpu.memory_space<vmem>>, vector<28x176xf32>
    %31 = arith.mulf %29, %30 : vector<28x176xf32>
    %cst_23 = arith.constant 5.000000e-01 : f32
    %32 = vector.broadcast %cst_23 : f32 to vector<28x176xf32>
    %33 = arith.mulf %32, %31 : vector<28x176xf32>
    %34 = math.tanh %33 : vector<28x176xf32>
    %cst_24 = arith.constant 1.000000e+00 : f32
    %35 = vector.broadcast %cst_24 : f32 to vector<28x176xf32>
    %36 = arith.addf %34, %35 : vector<28x176xf32>
    %cst_25 = arith.constant 5.000000e-01 : f32
    %37 = vector.broadcast %cst_25 : f32 to vector<28x176xf32>
    %38 = arith.mulf %37, %36 : vector<28x176xf32>
    %c0_26 = arith.constant 0 : index
    %c0_27 = arith.constant 0 : index
    %39 = vector.load %arg12[%c0_26, %c0_27] : memref<28x176xf32, #tpu.memory_space<vmem>>, vector<28x176xf32>
    tpu.vector_store %arg12[%c0_26, %c0_27], %38 {strides = array<i32>} : memref<28x176xf32, #tpu.memory_space<vmem>>, vector<28x176xf32>,
    %c0_28 = arith.constant 0 : index
    %c0_29 = arith.constant 0 : index
    %40 = vector.load %arg9[%c0_28, %c0_29] : memref<4x28xf32, #tpu.memory_space<vmem>>, vector<4x28xf32>
    %cst_30 = arith.constant dense<0.000000e+00> : vector<4x16xf32>
    %41 = tpu.matmul %40, %27, %cst_30 {dimension_numbers = #tpu.dot_dimension_numbers<[1], [0], [0], [1], [0, 0, 1, 1], [], []>} : vector<4x28xf32>, vector<28x16xf32>, vector<4x16xf32> -> vector<4x16xf32>
    %c0_31 = arith.constant 0 : index
    %c0_32 = arith.constant 0 : index
    %42 = vector.load %arg10[%c0_31, %c0_32] : memref<4x28xf32, #tpu.memory_space<vmem>>, vector<4x28xf32>
    %cst_33 = arith.constant dense<0.000000e+00> : vector<4x16xf32>
    %43 = tpu.matmul %42, %27, %cst_33 {dimension_numbers = #tpu.dot_dimension_numbers<[1], [0], [0], [1], [0, 0, 1, 1], [], []>} : vector<4x28xf32>, vector<28x16xf32>, vector<4x16xf32> -> vector<4x16xf32>
    %44 = arith.mulf %41, %43 : vector<4x16xf32>
    %cst_34 = arith.constant dense<0.000000e+00> : vector<4xf32>
    %45 = vector.multi_reduction <add>, %44, %cst_34 [1] : vector<4x16xf32> to vector<4xf32>
    %46 = vector.shape_cast %45 : vector<4xf32> to vector<4x1xf32>
    %cst_35 = arith.constant 5.000000e-01 : f32
    %47 = vector.broadcast %cst_35 : f32 to vector<4x1xf32>
    %48 = arith.mulf %47, %46 : vector<4x1xf32>
    %49 = math.tanh %48 : vector<4x1xf32>
    %cst_36 = arith.constant 1.000000e+00 : f32
    %50 = vector.broadcast %cst_36 : f32 to vector<4x1xf32>
    %51 = arith.addf %49, %50 : vector<4x1xf32>
    %cst_37 = arith.constant 5.000000e-01 : f32
    %52 = vector.broadcast %cst_37 : f32 to vector<4x1xf32>
    %53 = arith.mulf %52, %51 : vector<4x1xf32>
    %cst_38 = arith.constant dense<0.000000e+00> : vector<1xf32>
    %54 = vector.multi_reduction <add>, %53, %cst_38 [0] : vector<4x1xf32> to vector<1xf32>
    %55 = vector.shape_cast %54 : vector<1xf32> to vector<1x1xf32>
    %c0_39 = arith.constant 0 : index
    %c0_40 = arith.constant 0 : index
    %56 = vector.load %arg13[%c0_39, %c0_40] : memref<1x1xf32, #tpu.memory_space<vmem>>, vector<1x1xf32>
    tpu.vector_store %arg13[%c0_39, %c0_40], %55 {strides = array<i32>} : memref<1x1xf32, #tpu.memory_space<vmem>>, vector<1x1xf32>,
    return
  }
}

</mosaic_0001>

<llo_original>
// kernel: gcnnet_forward_device.1
$region0: #{gcnnet_forward_device.1}
  #allocation0 [shape = 'u32[]', space=smem, size = 0x4, offset = 0x4, fixed_abs, tag = 'smem constant byte address 0x4 - core index']
  #allocation1 [shape = 'u32[72,128]{1,0:T(1,128)}', space=vmem, size = 0x9000, scoped, tag = 'internal scratch']
  %s0 = inlined_call_operand.vmem [shape: f32[28,16], index: 0, kind: input, shape index: {}]
  %s1 = inlined_call_operand.vmem [shape: f32[28,176], index: 1, kind: input, shape index: {}]
  %s2 = inlined_call_operand.vmem [shape: f32[28,28], index: 2, kind: input, shape index: {}]
  %s3 = inlined_call_operand.vmem [shape: f32[28,28], index: 3, kind: input, shape index: {}]
  %s4 = inlined_call_operand.vmem [shape: f32[28,1], index: 4, kind: input, shape index: {}]
  %s5 = inlined_call_operand.vmem [shape: f32[28,28], index: 5, kind: input, shape index: {}]
  %s6 = inlined_call_operand.vmem [shape: f32[16,16], index: 6, kind: input, shape index: {}]
  %s7 = inlined_call_operand.vmem [shape: f32[1,16], index: 7, kind: input, shape index: {}]
  %s8 = inlined_call_operand.vmem [shape: f32[16,176], index: 8, kind: input, shape index: {}]
  %s9 = inlined_call_operand.vmem [shape: f32[4,28], index: 9, kind: input, shape index: {}]
  %s10 = inlined_call_operand.vmem [shape: f32[4,28], index: 10, kind: input, shape index: {}]
  %s11 = inlined_call_operand.vmem [shape: f32[3], index: 11, kind: input, shape index: {}]
  %s12 = inlined_call_operand.vmem [shape: f32[28,176], index: 12, kind: output, shape index: {0}]
  %s13 = inlined_call_operand.hbm [shape: f32[1,1], index: 13, kind: output, shape index: {1}]
  %14 = xla_tuple %s12, %s13
  %s15 = sld [smem:[#allocation0]]
  $region70: #{gcnnet_forward_device.1} parent=0
    _
  %s17 = ssub.s32 1, %s15
  %s18 = scalar_select 0, %s17, %s15
  $region1: #{gcnnet_forward_device.1} parent=0
    #allocation2 [shape = 'u8[512]{0}', space=smem, size = 0x200, scoped, tag = 'input window, operand 11, single buffered']
    #allocation3 [shape = 's32[1]{0}', space=sflag, size = 0x4, scoped, tag = 'scoped memory for gcnnet_forward_device.1']
    #allocation4 [shape = 's32[1]{0}', space=sflag, size = 0x4, scoped, tag = 'scoped memory for gcnnet_forward_device.1']
    #allocation5 [shape = 'u8[512]{0}', space=vmem, size = 0x400, scoped, tag = 'output window, operand 1, single buffered']
    %19 = vsyncpa [#allocation4], 0
    %20 = vsyncpa [#allocation3], 0
    // Predicated region
    $region2: #{gcnnet_forward_device.1} parent=1 // pred_check
      _
    $region3: #{gcnnet_forward_device.1} parent=1 // pred_check_branch
      %22 = sbr.rel (0) target = $region5
    $region4: #{gcnnet_forward_device.1} parent=1 // pred_region
      _
    $region5: #{gcnnet_forward_device.1} parent=1 // pred_fallthru
      _
    // Predicated region
    $region6: #{gcnnet_forward_device.1} parent=1 // pred_check
      _
    $region7: #{gcnnet_forward_device.1} parent=1 // pred_check_branch
      %24 = sbr.rel (0) target = $region9
    $region8: #{gcnnet_forward_device.1} parent=1 // pred_region
      _
    $region9: #{gcnnet_forward_device.1} parent=1 // pred_fallthru
      _
    // Predicated region
    $region10: #{gcnnet_forward_device.1} parent=1 // pred_check
      _
    $region11: #{gcnnet_forward_device.1} parent=1 // pred_check_branch
      %26 = sbr.rel (0) target = $region13
    $region12: #{gcnnet_forward_device.1} parent=1 // pred_region
      _
    $region13: #{gcnnet_forward_device.1} parent=1 // pred_fallthru
      _
    // Predicated region
    $region14: #{gcnnet_forward_device.1} parent=1 // pred_check
      _
    $region15: #{gcnnet_forward_device.1} parent=1 // pred_check_branch
      %28 = sbr.rel (0) target = $region17
    $region16: #{gcnnet_forward_device.1} parent=1 // pred_region
      _
    $region17: #{gcnnet_forward_device.1} parent=1 // pred_fallthru
      _
    // Predicated region
    $region18: #{gcnnet_forward_device.1} parent=1 // pred_check
      _
    $region19: #{gcnnet_forward_device.1} parent=1 // pred_check_branch
      %30 = sbr.rel (0) target = $region21
    $region20: #{gcnnet_forward_device.1} parent=1 // pred_region
      _
    $region21: #{gcnnet_forward_device.1} parent=1 // pred_fallthru
      _
    // Predicated region
    $region22: #{gcnnet_forward_device.1} parent=1 // pred_check
      _
    $region23: #{gcnnet_forward_device.1} parent=1 // pred_check_branch
      %32 = sbr.rel (0) target = $region25
    $region24: #{gcnnet_forward_device.1} parent=1 // pred_region
      _
    $region25: #{gcnnet_forward_device.1} parent=1 // pred_fallthru
      _
    // Predicated region
    $region26: #{gcnnet_forward_device.1} parent=1 // pred_check
      _
    $region27: #{gcnnet_forward_device.1} parent=1 // pred_check_branch
      %34 = sbr.rel (0) target = $region29
    $region28: #{gcnnet_forward_device.1} parent=1 // pred_region
      _
    $region29: #{gcnnet_forward_device.1} parent=1 // pred_fallthru
      _
    // Predicated region
    $region30: #{gcnnet_forward_device.1} parent=1 // pred_check
      _
    $region31: #{gcnnet_forward_device.1} parent=1 // pred_check_branch
      %36 = sbr.rel (0) target = $region33
    $region32: #{gcnnet_forward_device.1} parent=1 // pred_region
      _
    $region33: #{gcnnet_forward_device.1} parent=1 // pred_fallthru
      _
    // Predicated region
    $region34: #{gcnnet_forward_device.1} parent=1 // pred_check
      _
    $region35: #{gcnnet_forward_device.1} parent=1 // pred_check_branch
      %38 = sbr.rel (0) target = $region37
    $region36: #{gcnnet_forward_device.1} parent=1 // pred_region
      _
    $region37: #{gcnnet_forward_device.1} parent=1 // pred_fallthru
      _
    // Predicated region
    $region38: #{gcnnet_forward_device.1} parent=1 // pred_check
      _
    $region39: #{gcnnet_forward_device.1} parent=1 // pred_check_branch
      %40 = sbr.rel (0) target = $region41
    $region40: #{gcnnet_forward_device.1} parent=1 // pred_region
      _
    $region41: #{gcnnet_forward_device.1} parent=1 // pred_fallthru
      _
    // Predicated region
    $region42: #{gcnnet_forward_device.1} parent=1 // pred_check
      _
    $region43: #{gcnnet_forward_device.1} parent=1 // pred_check_branch
      %42 = sbr.rel (0) target = $region45
    $region44: #{gcnnet_forward_device.1} parent=1 // pred_region
      _
    $region45: #{gcnnet_forward_device.1} parent=1 // pred_fallthru
      _
    // Predicated region
    $region46: #{gcnnet_forward_device.1} parent=1 // pred_check
      _
    $region47: #{gcnnet_forward_device.1} parent=1 // pred_check_branch
      %44 = sbr.rel (0) target = $region49
    $region48: #{gcnnet_forward_device.1} parent=1 // pred_region
      %46 = vsyncadd [#allocation4], 0
      %s48 = sshll.u32 %s11, 4
      %s49 = int_to_ptr.vmem [resolvable:$true] %s48
      %51 = dma.vmem_to_smem %s49, 16, [#allocation2], [#allocation4]
    $region49: #{gcnnet_forward_device.1} parent=1 // pred_fallthru
      _
    // Predicated region
    $region50: #{gcnnet_forward_device.1} parent=1 // pred_check
      _
    $region51: #{gcnnet_forward_device.1} parent=1 // pred_check_branch
      %53 = sbr.rel (0) target = $region53
    $region52: #{gcnnet_forward_device.1} parent=1 // pred_region
      %55 = dma.done [#allocation4], 16
    $region53: #{gcnnet_forward_device.1} parent=1 // pred_fallthru
      _
    %56 = sfence
    %v57 = vld [vmem:[%s0] sm:$0xff]
    %v58 = vld [vmem:[%s0 + $0x8] sm:$0xff]
    %v59 = vld [vmem:[%s0 + $0x10] sm:$0xff]
    %v60 = vld [vmem:[%s0 + $0x18] sm:$0xf]
    %v61 = vld [vmem:[%s2] sm:$0xff]
    %v62 = vld [vmem:[%s2 + $0x8] sm:$0xff]
    %v63 = vld [vmem:[%s2 + $0x10] sm:$0xff]
    %v64 = vld [vmem:[%s2 + $0x18] sm:$0xf]
    %vm65 = vcmask 228352
    %v67 = vsel %vm65, %v61, 0
    %v70 = vsel %vm65, %v62, 0
    %v73 = vsel %vm65, %v63, 0
    %v76 = vsel %vm65, %v64, 0
    %vm78 = vcmask 1043456
    %v80 = vsel %vm78, %v60, 0
    %82 = vmatpush.msra.mxu0 0.0
    %83 = vmatpush.msra.mxu0 0.0
    %84 = vmatpush.msra.mxu0 0.0
    %85 = vmatpush.msra.mxu0 0.0
    %86 = vmatpush.msra.mxu0 0.0
    %87 = vmatpush.msra.mxu0 0.0
    %88 = vmatpush.msra.mxu0 0.0
    %89 = vmatpush.msra.mxu0 0.0
    %90 = vmatpush.msra.mxu0 0.0
    %91 = vmatpush.msra.mxu0 0.0
    %92 = vmatpush.msra.mxu0 0.0
    %93 = vmatpush.msra.mxu0 0.0
    %94 = vmatpush.msra.mxu0 %v80
    %95 = vmatpush.msra.mxu0 %v59
    %96 = vmatpush.msra.mxu0 %v58
    %97 = vmatpush.msra.mxu0 %v57
    %98 = vmatmul.f32.gmra.mxu0 %v67
    %v99 = vpop.f32.mrf.mxu0
    %v100 = vadd.f32 0.0, %v99
    %101 = vmatmul.f32.gmra.mxu0 %v70
    %v102 = vpop.f32.mrf.mxu0
    %v103 = vadd.f32 0.0, %v102
    %104 = vmatmul.f32.gmra.mxu0 %v73
    %v105 = vpop.f32.mrf.mxu0
    %v106 = vadd.f32 0.0, %v105
    %107 = vmatmul.f32.gmra.mxu0 %v76
    %v108 = vpop.f32.mrf.mxu0
    %v109 = vadd.f32 0.0, %v108
    %110 = vdwg.mxu0
    %vm111 = vcmask 130048
    %v113 = vsel %vm111, %v100, 0
    %v116 = vsel %vm111, %v103, 0
    %v119 = vsel %vm111, %v106, 0
    %v122 = vsel %vm111, %v109, 0
    %v125 = vsel %vm111, %v57, 0
    %v128 = vsel %vm111, %v58, 0
    %v131 = vsel %vm111, %v59, 0
    %v133 = vsel %vm111, %v60, 0
    %135 = vmatpush.xpose.msra.mxu0 0.0
    %136 = vmatpush.xpose.msra.mxu0 0.0
    %137 = vmatpush.xpose.msra.mxu0 0.0
    %138 = vmatpush.xpose.msra.mxu0 0.0
    %139 = vmatpush.xpose.msra.mxu0 0.0
    %140 = vmatpush.xpose.msra.mxu0 0.0
    %141 = vmatpush.xpose.msra.mxu0 0.0
    %142 = vmatpush.xpose.msra.mxu0 0.0
    %143 = vmatpush.xpose.msra.mxu0 0.0
    %144 = vmatpush.xpose.msra.mxu0 0.0
    %145 = vmatpush.xpose.msra.mxu0 0.0
    %146 = vmatpush.xpose.msra.mxu0 0.0
    %147 = vmatpush.xpose.msra.mxu0 %v133
    %148 = vmatpush.xpose.msra.mxu0 %v131
    %149 = vmatpush.xpose.msra.mxu0 %v128
    %150 = vmatpush.xpose.msra.mxu0 %v125
    %151 = vmatmul.f32.gmra.mxu0 %v113
    %v152 = vpop.f32.mrf.mxu0
    %v153 = vadd.f32 0.0, %v152
    %154 = vmatmul.f32.gmra.mxu0 %v116
    %v155 = vpop.f32.mrf.mxu0
    %v156 = vadd.f32 0.0, %v155
    %157 = vmatmul.f32.gmra.mxu0 %v119
    %v158 = vpop.f32.mrf.mxu0
    %v159 = vadd.f32 0.0, %v158
    %160 = vmatmul.f32.gmra.mxu0 %v122
    %v161 = vpop.f32.mrf.mxu0
    %v162 = vadd.f32 0.0, %v161
    %163 = vdwg.mxu0
    %v164 = vld [vmem:[%s3] sm:$0xff]
    %v165 = vld [vmem:[%s3 + $0x8] sm:$0xff]
    %v166 = vld [vmem:[%s3 + $0x10] sm:$0xff]
    %v167 = vld [vmem:[%s3 + $0x18] sm:$0xf]
    %v168 = vmul.f32 %v164, %v153
    %v169 = vmul.f32 %v165, %v156
    %v170 = vmul.f32 %v166, %v159
    %v171 = vmul.f32 %v167, %v162
    %v173 = vsel %vm65, %v168, 0
    %v176 = vsel %vm65, %v169, 0
    %v179 = vsel %vm65, %v170, 0
    %v182 = vsel %vm65, %v171, 0
    %184 = vmatpush.msra.mxu0 0.0
    %185 = vmatpush.msra.mxu0 0.0
    %186 = vmatpush.msra.mxu0 0.0
    %187 = vmatpush.msra.mxu0 0.0
    %188 = vmatpush.msra.mxu0 0.0
    %189 = vmatpush.msra.mxu0 0.0
    %190 = vmatpush.msra.mxu0 0.0
    %191 = vmatpush.msra.mxu0 0.0
    %192 = vmatpush.msra.mxu0 0.0
    %193 = vmatpush.msra.mxu0 0.0
    %194 = vmatpush.msra.mxu0 0.0
    %195 = vmatpush.msra.mxu0 0.0
    %196 = vmatpush.msra.mxu0 %v80
    %197 = vmatpush.msra.mxu0 %v59
    %198 = vmatpush.msra.mxu0 %v58
    %199 = vmatpush.msra.mxu0 %v57
    %200 = vmatmul.f32.gmra.mxu0 %v173
    %v201 = vpop.f32.mrf.mxu0
    %v202 = vadd.f32 0.0, %v201
    %203 = vmatmul.f32.gmra.mxu0 %v176
    %v204 = vpop.f32.mrf.mxu0
    %v205 = vadd.f32 0.0, %v204
    %206 = vmatmul.f32.gmra.mxu0 %v179
    %v207 = vpop.f32.mrf.mxu0
    %v208 = vadd.f32 0.0, %v207
    %209 = vmatmul.f32.gmra.mxu0 %v182
    %v210 = vpop.f32.mrf.mxu0
    %v211 = vadd.f32 0.0, %v210
    %212 = vdwg.mxu0
    %v213 = vld [vmem:[%s4] sm:$0xff]
    %v214 = vld [vmem:[%s4 + $0x8] sm:$0xff]
    %v215 = vld [vmem:[%s4 + $0x10] sm:$0xff]
    %v216 = vld [vmem:[%s4 + $0x18] sm:$0xf]
    %218 = vset.pattern.permute.xlu0 0
    %219 = vperm.xlu0 %218, %v213
    %v220 = vpop.permute.xlu0 %219
    %223 = vset.pattern.permute.xlu0 0
    %224 = vperm.xlu0 %223, %v214
    %v225 = vpop.permute.xlu0 %224
    %228 = vset.pattern.permute.xlu0 0
    %229 = vperm.xlu0 %228, %v215
    %v230 = vpop.permute.xlu0 %229
    %233 = vset.pattern.permute.xlu0 0
    %234 = vperm.xlu0 %233, %v216
    %v235 = vpop.permute.xlu0 %234
    %v237 = vmul.f32 %v202, %v220
    %v238 = vmul.f32 %v205, %v225
    %v239 = vmul.f32 %v208, %v230
    %v240 = vmul.f32 %v211, %v235
    %v241 = vld [vmem:[%s6] sm:$0xff]
    %v242 = vld [vmem:[%s6 + $0x8] sm:$0xff]
    %243 = vmatpush.msra.mxu0 0.0
    %244 = vmatpush.msra.mxu0 0.0
    %245 = vmatpush.msra.mxu0 0.0
    %246 = vmatpush.msra.mxu0 0.0
    %247 = vmatpush.msra.mxu0 0.0
    %248 = vmatpush.msra.mxu0 0.0
    %249 = vmatpush.msra.mxu0 0.0
    %250 = vmatpush.msra.mxu0 0.0
    %251 = vmatpush.msra.mxu0 0.0
    %252 = vmatpush.msra.mxu0 0.0
    %253 = vmatpush.msra.mxu0 0.0
    %254 = vmatpush.msra.mxu0 0.0
    %255 = vmatpush.msra.mxu0 0.0
    %256 = vmatpush.msra.mxu0 0.0
    %257 = vmatpush.msra.mxu0 %v242
    %258 = vmatpush.msra.mxu0 %v241
    %259 = vmatmul.f32.gmra.mxu0 %v125
    %v260 = vpop.f32.mrf.mxu0
    %v261 = vadd.f32 0.0, %v260
    %262 = vmatmul.f32.gmra.mxu0 %v128
    %v263 = vpop.f32.mrf.mxu0
    %v264 = vadd.f32 0.0, %v263
    %265 = vmatmul.f32.gmra.mxu0 %v131
    %v266 = vpop.f32.mrf.mxu0
    %v267 = vadd.f32 0.0, %v266
    %268 = vmatmul.f32.gmra.mxu0 %v133
    %v269 = vpop.f32.mrf.mxu0
    %v270 = vadd.f32 0.0, %v269
    %271 = vdwg.mxu0
    %v272 = vld [vmem:[%s5] sm:$0xff]
    %v273 = vld [vmem:[%s5 + $0x8] sm:$0xff]
    %v274 = vld [vmem:[%s5 + $0x10] sm:$0xff]
    %v275 = vld [vmem:[%s5 + $0x18] sm:$0xf]
    %v276 = vld [vmem:[%s7] sm:$0x1]
    %v278 = vperm.slane %v276, 0
    %v281 = vsel %vm65, %v272, 0
    %v284 = vsel %vm65, %v273, 0
    %v287 = vsel %vm65, %v274, 0
    %v290 = vsel %vm65, %v275, 0
    %v293 = vsel %vm78, %v270, 0
    %295 = vmatpush.msra.mxu0 0.0
    %296 = vmatpush.msra.mxu0 0.0
    %297 = vmatpush.msra.mxu0 0.0
    %298 = vmatpush.msra.mxu0 0.0
    %299 = vmatpush.msra.mxu0 0.0
    %300 = vmatpush.msra.mxu0 0.0
    %301 = vmatpush.msra.mxu0 0.0
    %302 = vmatpush.msra.mxu0 0.0
    %303 = vmatpush.msra.mxu0 0.0
    %304 = vmatpush.msra.mxu0 0.0
    %305 = vmatpush.msra.mxu0 0.0
    %306 = vmatpush.msra.mxu0 0.0
    %307 = vmatpush.msra.mxu0 %v293
    %308 = vmatpush.msra.mxu0 %v267
    %309 = vmatpush.msra.mxu0 %v264
    %310 = vmatpush.msra.mxu0 %v261
    %311 = vmatmul.f32.gmra.mxu0 %v281
    %v312 = vpop.f32.mrf.mxu0
    %v313 = vadd.f32 %v278, %v312
    %314 = vmatmul.f32.gmra.mxu0 %v284
    %v315 = vpop.f32.mrf.mxu0
    %v316 = vadd.f32 %v278, %v315
    %317 = vmatmul.f32.gmra.mxu0 %v287
    %v318 = vpop.f32.mrf.mxu0
    %v319 = vadd.f32 %v278, %v318
    %320 = vmatmul.f32.gmra.mxu0 %v290
    %v321 = vpop.f32.mrf.mxu0
    %v322 = vadd.f32 %v278, %v321
    %323 = vdwg.mxu0
    %s324 = sld [smem:[#allocation2]]
    %v325 = vstv %s324
    %v326 = vmul.f32 %v325, %v57
    %v327 = vmul.f32 %v325, %v58
    %v328 = vmul.f32 %v325, %v59
    %v329 = vmul.f32 %v325, %v60
    %s330 = sld [smem:[#allocation2 + $0x1]]
    %v331 = vstv %s330
    %v332 = vmul.f32 %v331, %v237
    %v333 = vmul.f32 %v331, %v238
    %v334 = vmul.f32 %v331, %v239
    %v335 = vmul.f32 %v331, %v240
    %v336 = vadd.f32 %v326, %v332
    %v337 = vadd.f32 %v327, %v333
    %v338 = vadd.f32 %v328, %v334
    %v339 = vadd.f32 %v329, %v335
    %s340 = sld [smem:[#allocation2 + $0x2]]
    %v341 = vstv %s340
    %v342 = vmul.f32 %v341, %v313
    %v343 = vmul.f32 %v341, %v316
    %v344 = vmul.f32 %v341, %v319
    %v345 = vmul.f32 %v341, %v322
    %v346 = vadd.f32 %v336, %v342
    %v347 = vadd.f32 %v337, %v343
    %v348 = vadd.f32 %v338, %v344
    %v349 = vadd.f32 %v339, %v345
    %v350 = vld [vmem:[%s8] sm:$0xff]
    %v351 = vld [vmem:[%s8 + $0x8] sm:$0xff]
    %v352 = vld [vmem:[%s8 + $0x10] sm:$0xff]
    %v353 = vld [vmem:[%s8 + $0x18] sm:$0xff]
    %v355 = vsel %vm111, %v346, 0
    %v358 = vsel %vm111, %v347, 0
    %v361 = vsel %vm111, %v348, 0
    %v364 = vsel %vm111, %v349, 0
    %366 = vmatpush.msra.mxu0 0.0
    %367 = vmatpush.msra.mxu0 0.0
    %368 = vmatpush.msra.mxu0 0.0
    %369 = vmatpush.msra.mxu0 0.0
    %370 = vmatpush.msra.mxu0 0.0
    %371 = vmatpush.msra.mxu0 0.0
    %372 = vmatpush.msra.mxu0 0.0
    %373 = vmatpush.msra.mxu0 0.0
    %374 = vmatpush.msra.mxu0 0.0
    %375 = vmatpush.msra.mxu0 0.0
    %376 = vmatpush.msra.mxu0 0.0
    %377 = vmatpush.msra.mxu0 0.0
    %378 = vmatpush.msra.mxu0 0.0
    %379 = vmatpush.msra.mxu0 0.0
    %380 = vmatpush.msra.mxu0 %v352
    %381 = vmatpush.msra.mxu0 %v350
    %382 = vmatmul.f32.gmra.mxu0 %v355
    %v383 = vpop.f32.mrf.mxu0
    %v384 = vadd.f32 0.0, %v383
    %385 = vmatmul.f32.gmra.mxu0 %v358
    %v386 = vpop.f32.mrf.mxu0
    %v387 = vadd.f32 0.0, %v386
    %388 = vmatmul.f32.gmra.mxu0 %v361
    %v389 = vpop.f32.mrf.mxu0
    %v390 = vadd.f32 0.0, %v389
    %391 = vmatmul.f32.gmra.mxu0 %v364
    %v392 = vpop.f32.mrf.mxu0
    %v393 = vadd.f32 0.0, %v392
    %394 = vdwg.mxu0
    %395 = vmatpush.msra.mxu0 0.0
    %396 = vmatpush.msra.mxu0 0.0
    %397 = vmatpush.msra.mxu0 0.0
    %398 = vmatpush.msra.mxu0 0.0
    %399 = vmatpush.msra.mxu0 0.0
    %400 = vmatpush.msra.mxu0 0.0
    %401 = vmatpush.msra.mxu0 0.0
    %402 = vmatpush.msra.mxu0 0.0
    %403 = vmatpush.msra.mxu0 0.0
    %404 = vmatpush.msra.mxu0 0.0
    %405 = vmatpush.msra.mxu0 0.0
    %406 = vmatpush.msra.mxu0 0.0
    %407 = vmatpush.msra.mxu0 0.0
    %408 = vmatpush.msra.mxu0 0.0
    %409 = vmatpush.msra.mxu0 %v353
    %410 = vmatpush.msra.mxu0 %v351
    %411 = vmatmul.f32.gmra.mxu0 %v355
    %v412 = vpop.f32.mrf.mxu0
    %v413 = vadd.f32 0.0, %v412
    %414 = vmatmul.f32.gmra.mxu0 %v358
    %v415 = vpop.f32.mrf.mxu0
    %v416 = vadd.f32 0.0, %v415
    %417 = vmatmul.f32.gmra.mxu0 %v361
    %v418 = vpop.f32.mrf.mxu0
    %v419 = vadd.f32 0.0, %v418
    %420 = vmatmul.f32.gmra.mxu0 %v364
    %v421 = vpop.f32.mrf.mxu0
    %v422 = vadd.f32 0.0, %v421
    %423 = vdwg.mxu0
    %v424 = vld [vmem:[%s1] sm:$0xff]
    %v425 = vld [vmem:[%s1 + $0x8] sm:$0xff]
    %v426 = vld [vmem:[%s1 + $0x10] sm:$0xff]
    %v427 = vld [vmem:[%s1 + $0x18] sm:$0xff]
    %v428 = vld [vmem:[%s1 + $0x20] sm:$0xff]
    %v429 = vld [vmem:[%s1 + $0x28] sm:$0xff]
    %v430 = vld [vmem:[%s1 + $0x30] sm:$0xf]
    %v431 = vld [vmem:[%s1 + $0x38] sm:$0xf]
    %v432 = vmul.f32 %v384, %v424
    %v433 = vmul.f32 %v413, %v425
    %v434 = vmul.f32 %v387, %v426
    %v435 = vmul.f32 %v416, %v427
    %v436 = vmul.f32 %v390, %v428
    %v437 = vmul.f32 %v419, %v429
    %v438 = vmul.f32 %v393, %v430
    %v439 = vmul.f32 %v422, %v431
    %v440 = vmul.f32 %v432, 0.5
    %v441 = vmul.f32 %v433, 0.5
    %v442 = vmul.f32 %v434, 0.5
    %v443 = vmul.f32 %v435, 0.5
    %v444 = vmul.f32 %v436, 0.5
    %v445 = vmul.f32 %v437, 0.5
    %v446 = vmul.f32 %v438, 0.5
    %v447 = vmul.f32 %v439, 0.5
    %v448 = vtanh.pop %v440
    %v449 = vtanh.pop %v441
    %v450 = vtanh.pop %v442
    %v451 = vtanh.pop %v443
    %v452 = vtanh.pop %v444
    %v453 = vtanh.pop %v445
    %v454 = vtanh.pop %v446
    %v455 = vtanh.pop %v447
    %v456 = vadd.f32 %v448, 1.0
    %v457 = vadd.f32 %v449, 1.0
    %v458 = vadd.f32 %v450, 1.0
    %v459 = vadd.f32 %v451, 1.0
    %v460 = vadd.f32 %v452, 1.0
    %v461 = vadd.f32 %v453, 1.0
    %v462 = vadd.f32 %v454, 1.0
    %v463 = vadd.f32 %v455, 1.0
    %v464 = vmul.f32 %v456, 0.5
    %v465 = vmul.f32 %v457, 0.5
    %v466 = vmul.f32 %v458, 0.5
    %v467 = vmul.f32 %v459, 0.5
    %v468 = vmul.f32 %v460, 0.5
    %v469 = vmul.f32 %v461, 0.5
    %v470 = vmul.f32 %v462, 0.5
    %v471 = vmul.f32 %v463, 0.5
    %472 = vst [vmem:[%s12] sm:$0xff] %v464
    %vm473 = vcmask 392192
    %474 = vst.msk [vmem:[%s12 + $0x8] sm:$0xff] %vm473, %v465
    %475 = vst [vmem:[%s12 + $0x10] sm:$0xff] %v466
    %476 = vst.msk [vmem:[%s12 + $0x18] sm:$0xff] %vm473, %v467
    %477 = vst [vmem:[%s12 + $0x20] sm:$0xff] %v468
    %478 = vst.msk [vmem:[%s12 + $0x28] sm:$0xff] %vm473, %v469
    %479 = vst [vmem:[%s12 + $0x30] sm:$0xf] %v470
    %vm480 = vcmask 388096
    %481 = vst.msk [vmem:[%s12 + $0x38] sm:$0xf] %vm480, %v471
    %v482 = vld [vmem:[%s9] sm:$0xf]
    %v484 = vsel %vm65, %v482, 0
    %v486 = vsel %vm78, %v349, 0
    %488 = vmatpush.msra.mxu0 0.0
    %489 = vmatpush.msra.mxu0 0.0
    %490 = vmatpush.msra.mxu0 0.0
    %491 = vmatpush.msra.mxu0 0.0
    %492 = vmatpush.msra.mxu0 0.0
    %493 = vmatpush.msra.mxu0 0.0
    %494 = vmatpush.msra.mxu0 0.0
    %495 = vmatpush.msra.mxu0 0.0
    %496 = vmatpush.msra.mxu0 0.0
    %497 = vmatpush.msra.mxu0 0.0
    %498 = vmatpush.msra.mxu0 0.0
    %499 = vmatpush.msra.mxu0 0.0
    %500 = vmatpush.msra.mxu0 %v486
    %501 = vmatpush.msra.mxu0 %v348
    %502 = vmatpush.msra.mxu0 %v347
    %503 = vmatpush.msra.mxu0 %v346
    %504 = vmatmul.f32.gmra.mxu0 %v484
    %v505 = vpop.f32.mrf.mxu0
    %v506 = vadd.f32 0.0, %v505
    %507 = vdwg.mxu0
    %v508 = vld [vmem:[%s10] sm:$0xf]
    %v510 = vsel %vm65, %v508, 0
    %512 = vmatpush.msra.mxu0 0.0
    %513 = vmatpush.msra.mxu0 0.0
    %514 = vmatpush.msra.mxu0 0.0
    %515 = vmatpush.msra.mxu0 0.0
    %516 = vmatpush.msra.mxu0 0.0
    %517 = vmatpush.msra.mxu0 0.0
    %518 = vmatpush.msra.mxu0 0.0
    %519 = vmatpush.msra.mxu0 0.0
    %520 = vmatpush.msra.mxu0 0.0
    %521 = vmatpush.msra.mxu0 0.0
    %522 = vmatpush.msra.mxu0 0.0
    %523 = vmatpush.msra.mxu0 0.0
    %524 = vmatpush.msra.mxu0 %v486
    %525 = vmatpush.msra.mxu0 %v348
    %526 = vmatpush.msra.mxu0 %v347
    %527 = vmatpush.msra.mxu0 %v346
    %528 = vmatmul.f32.gmra.mxu0 %v510
    %v529 = vpop.f32.mrf.mxu0
    %v530 = vadd.f32 0.0, %v529
    %531 = vdwg.mxu0
    %v532 = vmul.f32 %v506, %v530
    %vm533 = vcmask 125952
    %v534 = vsel %vm533, %v532, 0.0
    %535 = vadd.xlane.f32.xlu0 %v534
    %v536 = vpop.xlane.xlu0 %535
    %v537 = vmul.f32 %v536, 0.5
    %v538 = vtanh.pop %v537
    %v539 = vadd.f32 %v538, 1.0
    %v540 = vmul.f32 %v539, 0.5
    %v541 = vsel %vm78, %v540, 0.0
    %v542 = vrot.slane %v541, 4
    %v543 = vadd.f32 %v541, %v542
    %v544 = vrot.slane %v543, 2
    %v545 = vadd.f32 %v543, %v544
    %v546 = vrot.slane %v545, 1
    %v547 = vadd.f32 %v545, %v546
    %vm548 = vcmask 0
    %549 = vst.msk [vmem:[#allocation5] sm:$0x1] %vm548, %v547
    // Predicated region
    $region54: #{gcnnet_forward_device.1} parent=1 // pred_check
      _
    $region55: #{gcnnet_forward_device.1} parent=1 // pred_check_branch
      %551 = sbr.rel (0) target = $region57
    $region56: #{gcnnet_forward_device.1} parent=1 // pred_region
      _
    $region57: #{gcnnet_forward_device.1} parent=1 // pred_fallthru
      _
    // Predicated region
    $region58: #{gcnnet_forward_device.1} parent=1 // pred_check
      _
    $region59: #{gcnnet_forward_device.1} parent=1 // pred_check_branch
      %553 = sbr.rel (0) target = $region61
    $region60: #{gcnnet_forward_device.1} parent=1 // pred_region
      %555 = vsyncadd [#allocation3], 0
      %s557 = sshll.u32 [#allocation5], 4
      %s558 = int_to_ptr.vmem [resolvable:$true] %s557
      %s559 = sshll.u32 %s13, 4
      %s560 = int_to_ptr.hbm [resolvable:$true] %s559
      %562 = dma.vmem_to_hbm [thread:$0]  %s558, 16, %s560, [#allocation3]
    $region61: #{gcnnet_forward_device.1} parent=1 // pred_fallthru
      _
    // Predicated region
    $region62: #{gcnnet_forward_device.1} parent=1 // pred_check
      _
    $region63: #{gcnnet_forward_device.1} parent=1 // pred_check_branch
      %564 = sbr.rel (0) target = $region65
    $region64: #{gcnnet_forward_device.1} parent=1 // pred_region
      _
    $region65: #{gcnnet_forward_device.1} parent=1 // pred_fallthru
      _
    // Predicated region
    $region66: #{gcnnet_forward_device.1} parent=1 // pred_check
      _
    $region67: #{gcnnet_forward_device.1} parent=1 // pred_check_branch
      %566 = sbr.rel (0) target = $region69
    $region68: #{gcnnet_forward_device.1} parent=1 // pred_region
      %568 = dma.done [#allocation3], 16
    $region69: #{gcnnet_forward_device.1} parent=1 // pred_fallthru
      _
    %569 = vsyncpa [#allocation3], 1
    %570 = vsyncpa [#allocation4], 1

</llo_original>
